<compile_context>
chip_gen: v7x
topology: tpu7x:2x2x1
jax: 0.10.0
libtpu: 0.0.40
codegen_flags: <defaults>
</compile_context>

<pallas_src>
import numpy as np
from math import log, sqrt
from functools import partial

import jax
import jax.numpy as jnp
from jax.experimental import pallas as pl
from jax.experimental.pallas import tpu as pltpu


def _round_up(x, m):
    return (x + m - 1) // m * m


_PE_CACHE = {}


def _pe_table(seq_len, d_model, d_pad):
    """PositionalEncoding buffer pe[:seq_len, :d_model], zero-padded to d_pad lanes (cached)."""
    key = (seq_len, d_model, d_pad)
    if key not in _PE_CACHE:
        position = np.arange(seq_len, dtype=np.float32)[:, None]
        div_term = np.exp(np.arange(0, d_model, 2, dtype=np.float32) * (-log(10000.0) / d_model))
        ang = position * div_term                                              # (L, ceil(d/2))
        pe = np.zeros((seq_len, d_pad), dtype=np.float32)
        pe[:, 0:d_model:2] = np.sin(ang)
        pe[:, 1:d_model:2] = np.cos(ang)[:, : d_model // 2]
        _PE_CACHE[key] = jnp.asarray(pe)
    return _PE_CACHE[key]


def _embed_kernel(x_ref, w_ref, pe_ref, o_ref, *, TL, B_blk, tiled):
    # x_ref : (B_blk, c_in, L+2)  circularly-haloed input rows (full seq length resident)
    # w_ref : (3, c_in, d_pad)    conv weight, kernel-tap major, pre-scaled by 2
    # pe_ref: (TL, d_pad)         positional-encoding tile (resident across the inner batch loop)
    # o_ref : (B_blk, TL, d_pad)  lane-dense output block
    if tiled:
        start = pl.multiple_of(pl.program_id(0) * TL, TL)
    else:
        start = 0                                            # single L tile -> fully static slices
    pe = pe_ref[...]
    w0, w1, w2 = w_ref[0], w_ref[1], w_ref[2]
    dn = (((0,), (0,)), ((), ()))                            # contract the tiny c_in dim (sublanes)
    for b in range(B_blk):                                   # small & static -> unrolled
        y = jax.lax.dot_general(x_ref[b, :, pl.ds(start, TL)], w0, dn,
                                preferred_element_type=jnp.float32)
        y = y + jax.lax.dot_general(x_ref[b, :, pl.ds(start + 1, TL)], w1, dn,
                                    preferred_element_type=jnp.float32)
        y = y + jax.lax.dot_general(x_ref[b, :, pl.ds(start + 2, TL)], w2, dn,
                                    preferred_element_type=jnp.float32)
        o_ref[b] = (y + pe).astype(o_ref.dtype)


def data_embedding(x, w_conv, out_dtype=None):
    """x: (B, L, c_in) float32;  w_conv: (d_model, c_in, 3) PyTorch Conv1d weight layout."""
    B, L, c_in = x.shape
    d_model = w_conv.shape[0]
    out_dtype = x.dtype if out_dtype is None else out_dtype   # pass bf16 to halve output HBM traffic
    d_pad = _round_up(d_model, 128)

    # ---- generation-aware VMEM budget ---------------------------------------------------------
    try:
        vmem_cap = int(pltpu.get_tpu_info().vmem_capacity_bytes)
    except Exception:
        vmem_cap = 64 << 20                                   # conservative (v7x-sized) fallback
    big_vmem = vmem_cap >= (100 << 20)                        # v5e/v6e: 128 MiB, v7x: 64 MiB
    budget = (28 << 20) if big_vmem else (14 << 20)

    def bytes_needed(tl, b_blk):
        blocks = (b_blk * c_in * (L + 2)                      # x rows
                  + 3 * c_in * d_pad                          # weights
                  + tl * d_pad                                # pe tile
                  + b_blk * tl * d_pad)                       # output block
        temps = tl * d_pad + 3 * c_in * tl                    # f32 accumulator + window loads
        return 4 * (2 * blocks + temps)                       # f32, double-buffered blocks

    # ---- L tiling: never pad L; tile only when L is already a 128 multiple --------------------
    if L % 128 == 0:
        cands = ([L] if L <= 512 else []) + [t for t in (512, 256, 128) if t < L and L % t == 0]
        TL = next((t for t in cands if bytes_needed(t, 1) <= budget), cands[-1])
    else:
        # single full-length tile (typical AnomalyTransformer win_size ~100)
        # TODO(synk): very long non-128-multiple L would need halo-aware L padding + tiling.
        TL = L
    n_lt = L // TL

    # ---- fold small batches into the block to amortise per-step overhead ----------------------
    B_blk = 1
    for cand in range(min(B, 8), 0, -1):
        if B % cand == 0 and bytes_needed(TL, cand) <= budget:
            B_blk = cand
            break
    n_bt = B // B_blk

    # ---- inputs --------------------------------------------------------------------------------
    # circular halo (1 column each side): ext[b, c, j] = x[b, (j-1) mod L, c]
    xc = jnp.transpose(x, (0, 2, 1))                                           # (B, c_in, L)
    ext = jnp.concatenate([xc[:, :, L - 1:], xc, xc[:, :, :1]], axis=2)        # (B, c_in, L+2)

    # weights: w_flat[k, c, d] = 2 * w_conv[d, c, k]  (the "2*" of v + (v + pe) folded in)
    w_flat = 2.0 * jnp.transpose(w_conv, (2, 1, 0))                            # (3, c_in, d_model)
    if d_pad != d_model:
        w_flat = jnp.pad(w_flat, ((0, 0), (0, 0), (0, d_pad - d_model)))

    pe = _pe_table(L, d_model, d_pad)                                          # (L, d_pad), cached

    need = bytes_needed(TL, B_blk)
    limit_cap = (100 << 20) if big_vmem else (48 << 20)                        # v7x headroom
    vmem_limit = int(min(max(need + (8 << 20), 32 << 20), limit_cap, vmem_cap))

    kernel = partial(_embed_kernel, TL=TL, B_blk=B_blk, tiled=n_lt > 1)

    out = pl.pallas_call(
        kernel,
        out_shape=jax.ShapeDtypeStruct((B, L, d_pad), out_dtype),
        grid=(n_lt, n_bt),                        # L-tile OUTER, batch INNER -> pe block resident
        in_specs=[
            pl.BlockSpec((B_blk, c_in, L + 2), lambda lt, bt: (bt, 0, 0)),
            pl.BlockSpec((3, c_in, d_pad), lambda lt, bt: (0, 0, 0)),
            pl.BlockSpec((TL, d_pad), lambda lt, bt: (lt, 0)),
        ],
        out_specs=pl.BlockSpec((B_blk, TL, d_pad), lambda lt, bt: (bt, lt, 0)),
        compiler_params=pltpu.CompilerParams(
            # Shard the L-tile axis across the v7x megacore so pe is fetched once per tile;
            # with a single L tile let the batch axis be the parallel one instead.
            dimension_semantics=("parallel", "arbitrary" if n_lt > 1 else "parallel"),
            vmem_limit_bytes=vmem_limit,
        ),
    )(ext, w_flat, pe)

    if d_pad != d_model:
        out = out[:, :, :d_model]                 # skipped entirely when d_model is 128-aligned
    return out


def _reference(x, w_conv):
    """Pure-JAX reference of DataEmbedding.forward for validation."""
    B, L, c_in = x.shape
    d_model = w_conv.shape[0]
    xc = jnp.transpose(x, (0, 2, 1))                                           # (B, c_in, L)
    xc = jnp.concatenate([xc[:, :, -1:], xc, xc[:, :, :1]], axis=-1)           # circular pad
    y = jax.lax.conv_general_dilated(
        xc, w_conv, window_strides=(1,), padding="VALID",
        dimension_numbers=("NCH", "OIH", "NCH"))
    y = jnp.transpose(y, (0, 2, 1))                                            # (B, L, d_model)
    pe = _pe_table(L, d_model, _round_up(d_model, 128))[:, :d_model]
    return 2.0 * y + pe[None]


if __name__ == "__main__":
    B, L, c_in, d_model = 2, 8, 4, 32

    key = jax.random.PRNGKey(0)
    k_x, k_w = jax.random.split(key)

    x = jax.random.normal(k_x, (B, L, c_in), dtype=jnp.float32)

    # kaiming_normal_(mode='fan_in', nonlinearity='leaky_relu', a=0): std = sqrt(2)/sqrt(fan_in)
    fan_in = c_in * 3
    std = sqrt(2.0) / sqrt(fan_in)
    w_conv = std * jax.random.normal(k_w, (d_model, c_in, 3), dtype=jnp.float32)

    out = data_embedding(x, w_conv)
    out = jax.block_until_ready(out)

    ref = _reference(x, w_conv)
    np.testing.assert_allclose(np.asarray(out), np.asarray(ref), rtol=1e-5, atol=1e-5)

    print("KERNEL_OK")
</pallas_src>

<mosaic_0001>
module attributes {stable_mosaic.version = 11 : i64} {
  func.func @_embed_kernel(%arg0: i32, %arg1: i32, %arg2: memref<2x4x10xf32, #tpu.memory_space<vmem>>, %arg3: memref<3x4x128xf32, #tpu.memory_space<vmem>>, %arg4: memref<8x128xf32, #tpu.memory_space<vmem>>, %arg5: memref<2x8x128xf32, #tpu.memory_space<vmem>>) attributes {dimension_semantics = [#tpu.dimension_semantics<parallel>, #tpu.dimension_semantics<parallel>], iteration_bounds = array<i64: 1, 1>, scalar_prefetch = 0 : i64, scratch_operands = 0 : i64, tpu.core_type = #tpu.core_type<tc>, window_params = [{transform_indices = @transform_0, window_bounds = array<i64: 2, 4, 10>}, {pipeline_mode = #tpu.pipeline_mode<synchronous>, transform_indices = @transform_1, window_bounds = array<i64: 3, 4, 128>}, {transform_indices = @transform_2, window_bounds = array<i64: 8, 128>}, {transform_indices = @transform_3, window_bounds = array<i64: 2, 8, 128>}]} {
    %c0 = arith.constant 0 : index
    %c0_0 = arith.constant 0 : index
    %0 = vector.load %arg4[%c0, %c0_0] : memref<8x128xf32, #tpu.memory_space<vmem>>, vector<8x128xf32>
    %c0_1 = arith.constant 0 : index
    %c0_2 = arith.constant 0 : index
    %c0_3 = arith.constant 0 : index
    %1 = vector.load %arg3[%c0_1, %c0_2, %c0_3] : memref<3x4x128xf32, #tpu.memory_space<vmem>>, vector<1x4x128xf32>
    %2 = vector.shape_cast %1 : vector<1x4x128xf32> to vector<4x128xf32>
    %c1 = arith.constant 1 : index
    %c0_4 = arith.constant 0 : index
    %c0_5 = arith.constant 0 : index
    %3 = vector.load %arg3[%c1, %c0_4, %c0_5] : memref<3x4x128xf32, #tpu.memory_space<vmem>>, vector<1x4x128xf32>
    %4 = vector.shape_cast %3 : vector<1x4x128xf32> to vector<4x128xf32>
    %c2 = arith.constant 2 : index
    %c0_6 = arith.constant 0 : index
    %c0_7 = arith.constant 0 : index
    %5 = vector.load %arg3[%c2, %c0_6, %c0_7] : memref<3x4x128xf32, #tpu.memory_space<vmem>>, vector<1x4x128xf32>
    %6 = vector.shape_cast %5 : vector<1x4x128xf32> to vector<4x128xf32>
    %c0_8 = arith.constant 0 : index
    %c0_9 = arith.constant 0 : index
    %c0_10 = arith.constant 0 : index
    %7 = vector.load %arg2[%c0_8, %c0_9, %c0_10] : memref<2x4x10xf32, #tpu.memory_space<vmem>>, vector<1x4x8xf32>
    %8 = vector.shape_cast %7 : vector<1x4x8xf32> to vector<4x8xf32>
    %cst = arith.constant dense<0.000000e+00> : vector<8x128xf32>
    %9 = tpu.matmul %8, %2, %cst {dimension_numbers = #tpu.dot_dimension_numbers<[0], [0], [1], [1], [0, 1, 1, 1], [], []>} : vector<4x8xf32>, vector<4x128xf32>, vector<8x128xf32> -> vector<8x128xf32>
    %c0_11 = arith.constant 0 : index
    %c0_12 = arith.constant 0 : index
    %c1_13 = arith.constant 1 : index
    %10 = vector.load %arg2[%c0_11, %c0_12, %c1_13] : memref<2x4x10xf32, #tpu.memory_space<vmem>>, vector<1x4x8xf32>
    %11 = vector.shape_cast %10 : vector<1x4x8xf32> to vector<4x8xf32>
    %cst_14 = arith.constant dense<0.000000e+00> : vector<8x128xf32>
    %12 = tpu.matmul %11, %4, %cst_14 {dimension_numbers = #tpu.dot_dimension_numbers<[0], [0], [1], [1], [0, 1, 1, 1], [], []>} : vector<4x8xf32>, vector<4x128xf32>, vector<8x128xf32> -> vector<8x128xf32>
    %13 = arith.addf %9, %12 : vector<8x128xf32>
    %c0_15 = arith.constant 0 : index
    %c0_16 = arith.constant 0 : index
    %c2_17 = arith.constant 2 : index
    %14 = vector.load %arg2[%c0_15, %c0_16, %c2_17] : memref<2x4x10xf32, #tpu.memory_space<vmem>>, vector<1x4x8xf32>
    %15 = vector.shape_cast %14 : vector<1x4x8xf32> to vector<4x8xf32>
    %cst_18 = arith.constant dense<0.000000e+00> : vector<8x128xf32>
    %16 = tpu.matmul %15, %6, %cst_18 {dimension_numbers = #tpu.dot_dimension_numbers<[0], [0], [1], [1], [0, 1, 1, 1], [], []>} : vector<4x8xf32>, vector<4x128xf32>, vector<8x128xf32> -> vector<8x128xf32>
    %17 = arith.addf %13, %16 : vector<8x128xf32>
    %18 = arith.addf %17, %0 : vector<8x128xf32>
    %c0_19 = arith.constant 0 : index
    %c0_20 = arith.constant 0 : index
    %c0_21 = arith.constant 0 : index
    %19 = vector.load %arg5[%c0_19, %c0_20, %c0_21] : memref<2x8x128xf32, #tpu.memory_space<vmem>>, vector<1x8x128xf32>
    %20 = vector.shape_cast %19 : vector<1x8x128xf32> to vector<8x128xf32>
    %21 = vector.shape_cast %18 : vector<8x128xf32> to vector<1x8x128xf32>
    tpu.vector_store %arg5[%c0_19, %c0_20, %c0_21], %21 {strides = array<i32>} : memref<2x8x128xf32, #tpu.memory_space<vmem>>, vector<1x8x128xf32>,
    %c1_22 = arith.constant 1 : index
    %c0_23 = arith.constant 0 : index
    %c0_24 = arith.constant 0 : index
    %22 = vector.load %arg2[%c1_22, %c0_23, %c0_24] : memref<2x4x10xf32, #tpu.memory_space<vmem>>, vector<1x4x8xf32>
    %23 = vector.shape_cast %22 : vector<1x4x8xf32> to vector<4x8xf32>
    %cst_25 = arith.constant dense<0.000000e+00> : vector<8x128xf32>
    %24 = tpu.matmul %23, %2, %cst_25 {dimension_numbers = #tpu.dot_dimension_numbers<[0], [0], [1], [1], [0, 1, 1, 1], [], []>} : vector<4x8xf32>, vector<4x128xf32>, vector<8x128xf32> -> vector<8x128xf32>
    %c1_26 = arith.constant 1 : index
    %c0_27 = arith.constant 0 : index
    %c1_28 = arith.constant 1 : index
    %25 = vector.load %arg2[%c1_26, %c0_27, %c1_28] : memref<2x4x10xf32, #tpu.memory_space<vmem>>, vector<1x4x8xf32>
    %26 = vector.shape_cast %25 : vector<1x4x8xf32> to vector<4x8xf32>
    %cst_29 = arith.constant dense<0.000000e+00> : vector<8x128xf32>
    %27 = tpu.matmul %26, %4, %cst_29 {dimension_numbers = #tpu.dot_dimension_numbers<[0], [0], [1], [1], [0, 1, 1, 1], [], []>} : vector<4x8xf32>, vector<4x128xf32>, vector<8x128xf32> -> vector<8x128xf32>
    %28 = arith.addf %24, %27 : vector<8x128xf32>
    %c1_30 = arith.constant 1 : index
    %c0_31 = arith.constant 0 : index
    %c2_32 = arith.constant 2 : index
    %29 = vector.load %arg2[%c1_30, %c0_31, %c2_32] : memref<2x4x10xf32, #tpu.memory_space<vmem>>, vector<1x4x8xf32>
    %30 = vector.shape_cast %29 : vector<1x4x8xf32> to vector<4x8xf32>
    %cst_33 = arith.constant dense<0.000000e+00> : vector<8x128xf32>
    %31 = tpu.matmul %30, %6, %cst_33 {dimension_numbers = #tpu.dot_dimension_numbers<[0], [0], [1], [1], [0, 1, 1, 1], [], []>} : vector<4x8xf32>, vector<4x128xf32>, vector<8x128xf32> -> vector<8x128xf32>
    %32 = arith.addf %28, %31 : vector<8x128xf32>
    %33 = arith.addf %32, %0 : vector<8x128xf32>
    %c1_34 = arith.constant 1 : index
    %c0_35 = arith.constant 0 : index
    %c0_36 = arith.constant 0 : index
    %34 = vector.load %arg5[%c1_34, %c0_35, %c0_36] : memref<2x8x128xf32, #tpu.memory_space<vmem>>, vector<1x8x128xf32>
    %35 = vector.shape_cast %34 : vector<1x8x128xf32> to vector<8x128xf32>
    %36 = vector.shape_cast %33 : vector<8x128xf32> to vector<1x8x128xf32>
    tpu.vector_store %arg5[%c1_34, %c0_35, %c0_36], %36 {strides = array<i32>} : memref<2x8x128xf32, #tpu.memory_space<vmem>>, vector<1x8x128xf32>,
    return
  }
  func.func @transform_0(%arg0: i32, %arg1: i32) -> (i32, i32, i32) {
    %c0_i32 = arith.constant 0 : i32
    %c0_i32_0 = arith.constant 0 : i32
    %c0_i32_1 = arith.constant 0 : i32
    return %arg1, %c0_i32, %c0_i32_0 : i32, i32, i32
  }
  func.func @transform_1(%arg0: i32, %arg1: i32) -> (i32, i32, i32) {
    %c0_i32 = arith.constant 0 : i32
    %c0_i32_0 = arith.constant 0 : i32
    %c0_i32_1 = arith.constant 0 : i32
    %c0_i32_2 = arith.constant 0 : i32
    return %c0_i32, %c0_i32_0, %c0_i32_1 : i32, i32, i32
  }
  func.func @transform_2(%arg0: i32, %arg1: i32) -> (i32, i32) {
    %c0_i32 = arith.constant 0 : i32
    %c0_i32_0 = arith.constant 0 : i32
    return %arg0, %c0_i32 : i32, i32
  }
  func.func @transform_3(%arg0: i32, %arg1: i32) -> (i32, i32, i32) {
    %c0_i32 = arith.constant 0 : i32
    %c0_i32_0 = arith.constant 0 : i32
    return %arg1, %arg0, %c0_i32 : i32, i32, i32
  }
}

</mosaic_0001>

<llo_original>
// kernel: tpu_custom_call.1
$region0: #{tpu_custom_call.1}
  #allocation0 [shape = 'u32[]', space=smem, size = 0x4, offset = 0x4, fixed_abs, tag = 'smem constant byte address 0x4 - core index']
  #allocation1 [shape = 'u32[144,128]{1,0:T(1,128)}', space=vmem, size = 0x12000, scoped, tag = 'internal scratch']
  %s0 = inlined_call_operand.hbm [shape: f32[2,4,10], index: 0, kind: input, shape index: {}]
  %s1 = inlined_call_operand.hbm [shape: f32[3,4,128], index: 1, kind: input, shape index: {}]
  %s2 = inlined_call_operand.hbm [shape: f32[8,128], index: 2, kind: input, shape index: {}]
  %s3 = inlined_call_operand.hbm [shape: f32[2,8,128], index: 3, kind: output, shape index: {}]
  %s4 = sld [smem:[#allocation0]]
  $region34: #{tpu_custom_call.1} parent=0
    _
  %s6 = ssub.s32 1, %s4
  %s7 = scalar_select 0, %s6, %s4
  $region1: #{tpu_custom_call.1} parent=0
    #allocation2 [shape = 'u8[4096]{0}', space=vmem, size = 0x1000, scoped, tag = 'input window, operand 0, single buffered']
    #allocation3 [shape = 's32[1]{0}', space=sflag, size = 0x4, scoped, tag = 'scoped memory for tpu_custom_call.1']
    #allocation4 [shape = 's32[1]{0}', space=sflag, size = 0x4, scoped, tag = 'scoped memory for tpu_custom_call.1']
    #allocation5 [shape = 'u8[6144]{0}', space=vmem, size = 0x1800, scoped, tag = 'input window, operand 1, single buffered']
    #allocation6 [shape = 's32[1]{0}', space=sflag, size = 0x4, scoped, tag = 'scoped memory for tpu_custom_call.1']
    #allocation7 [shape = 'u8[4096]{0}', space=vmem, size = 0x1000, scoped, tag = 'input window, operand 2, single buffered']
    #allocation8 [shape = 'u8[8192]{0}', space=vmem, size = 0x2000, scoped, tag = 'output window, operand 0, single buffered']
    %8 = vsyncpa [#allocation3], 0
    %9 = vsyncpa [#allocation6], 0
    %10 = vsyncpa [#allocation4], 0
    // Predicated region
    $region2: #{tpu_custom_call.1} parent=1 // pred_check
      _
    $region3: #{tpu_custom_call.1} parent=1 // pred_check_branch
      %12 = sbr.rel (0) target = $region5
    $region4: #{tpu_custom_call.1} parent=1 // pred_region
      %s14 = ssub.s32 128, 128
      %15 = vsyncadd [#allocation3], %s14
      %s16 = sshll.u32 [#allocation2], 4
      %s17 = int_to_ptr.vmem [resolvable:$true] %s16
      %22 = dma.hbm_to_vmem [thread:$0]  %s0, 128, %s17, [#allocation3], 64, 64, 4
    $region5: #{tpu_custom_call.1} parent=1 // pred_fallthru
      _
    // Predicated region
    $region6: #{tpu_custom_call.1} parent=1 // pred_check
      _
    $region7: #{tpu_custom_call.1} parent=1 // pred_check_branch
      %24 = sbr.rel (0) target = $region9
    $region8: #{tpu_custom_call.1} parent=1 // pred_region
      %s26 = ssub.s32 192, 192
      %27 = vsyncadd [#allocation6], %s26
      %s28 = sshll.u32 [#allocation5], 4
      %s29 = int_to_ptr.vmem [resolvable:$true] %s28
      %34 = dma.hbm_to_vmem [thread:$0]  %s1, 192, %s29, [#allocation6], 64, 64, 4
    $region9: #{tpu_custom_call.1} parent=1 // pred_fallthru
      _
    // Predicated region
    $region10: #{tpu_custom_call.1} parent=1 // pred_check
      _
    $region11: #{tpu_custom_call.1} parent=1 // pred_check_branch
      %36 = sbr.rel (0) target = $region13
    $region12: #{tpu_custom_call.1} parent=1 // pred_region
      %s38 = ssub.s32 128, 128
      %39 = vsyncadd [#allocation6], %s38
      %s41 = sshll.u32 [#allocation7], 4
      %s42 = int_to_ptr.vmem [resolvable:$true] %s41
      %44 = dma.hbm_to_vmem [thread:$0]  %s2, 128, %s42, [#allocation6]
    $region13: #{tpu_custom_call.1} parent=1 // pred_fallthru
      _
    // Predicated region
    $region14: #{tpu_custom_call.1} parent=1 // pred_check
      _
    $region15: #{tpu_custom_call.1} parent=1 // pred_check_branch
      %46 = sbr.rel (0) target = $region17
    $region16: #{tpu_custom_call.1} parent=1 // pred_region
      %47 = dma.done [#allocation3], 128
    $region17: #{tpu_custom_call.1} parent=1 // pred_fallthru
      _
    // Predicated region
    $region18: #{tpu_custom_call.1} parent=1 // pred_check
      _
    $region19: #{tpu_custom_call.1} parent=1 // pred_check_branch
      %49 = sbr.rel (0) target = $region21
    $region20: #{tpu_custom_call.1} parent=1 // pred_region
      %50 = dma.done [#allocation6], 192
    $region21: #{tpu_custom_call.1} parent=1 // pred_fallthru
      _
    // Predicated region
    $region22: #{tpu_custom_call.1} parent=1 // pred_check
      _
    $region23: #{tpu_custom_call.1} parent=1 // pred_check_branch
      %52 = sbr.rel (0) target = $region25
    $region24: #{tpu_custom_call.1} parent=1 // pred_region
      %53 = dma.done [#allocation6], 128
    $region25: #{tpu_custom_call.1} parent=1 // pred_fallthru
      _
    %v54 = vld [vmem:[#allocation7] sm:$0xff]
    %v55 = vld [vmem:[#allocation5] sm:$0xf]
    %s56 = scalar_lea.vmem [#allocation5], 4
    %v57 = vld [vmem:[%s56] sm:$0xf]
    %s58 = scalar_lea.vmem [#allocation5], 8
    %v59 = vld [vmem:[%s58] sm:$0xf]
    %v60 = vld [vmem:[#allocation2] sm:$0xf]
    %62 = vrot.lane.b32.xlu0 %v60, 127
    %v63 = vpop.permute.xlu0 %62
    %65 = vxpose.xlu0.b32.start [1/16] %v63, 128
    %66 = vxpose.xlu0.b32.cont [2/16] 0.0, 128
    %67 = vxpose.xlu0.b32.cont [3/16] 0.0, 128
    %68 = vxpose.xlu0.b32.cont [4/16] 0.0, 128
    %69 = vxpose.xlu0.b32.cont [5/16] 0.0, 128
    %70 = vxpose.xlu0.b32.cont [6/16] 0.0, 128
    %71 = vxpose.xlu0.b32.cont [7/16] 0.0, 128
    %72 = vxpose.xlu0.b32.cont [8/16] 0.0, 128
    %73 = vxpose.xlu0.b32.cont [9/16] 0.0, 128
    %74 = vxpose.xlu0.b32.cont [10/16] 0.0, 128
    %75 = vxpose.xlu0.b32.cont [11/16] 0.0, 128
    %76 = vxpose.xlu0.b32.cont [12/16] 0.0, 128
    %77 = vxpose.xlu0.b32.cont [13/16] 0.0, 128
    %78 = vxpose.xlu0.b32.cont [14/16] 0.0, 128
    %79 = vxpose.xlu0.b32.cont [15/16] 0.0, 128
    %80 = vxpose.xlu0.b32.end [16/16] 0.0, 128
    %v81 = vpop.trf.xlu0
    %v82 = vpop.trf.xlu0
    %v83 = vpop.trf.xlu0
    %v84 = vpop.trf.xlu0
    %v85 = vpop.trf.xlu0
    %v86 = vpop.trf.xlu0
    %v87 = vpop.trf.xlu0
    %v88 = vpop.trf.xlu0
    %v89 = vpop.trf.xlu0
    %v90 = vpop.trf.xlu0
    %v91 = vpop.trf.xlu0
    %v92 = vpop.trf.xlu0
    %v93 = vpop.trf.xlu0
    %v94 = vpop.trf.xlu0
    %v95 = vpop.trf.xlu0
    %v96 = vpop.trf.xlu0
    %vm97 = vcmask 31744
    %v99 = vsel %vm97, %v81, 0
    %vm101 = vcmask 1043456
    %v103 = vsel %vm101, %v57, 0
    %105 = vmatprep.subr.mxu0 0.0
    %106 = vmatpush1.msra.mxu0 %v103
    %107 = vmatprep.subr.mxu0 0.0
    %108 = vmatpush1.msra.mxu0 0.0
    %109 = vmatprep.subr.mxu0 0.0
    %110 = vmatpush1.msra.mxu0 0.0
    %111 = vmatprep.subr.mxu0 0.0
    %112 = vmatpush1.msra.mxu0 0.0
    %113 = vmatprep.subr.mxu0 0.0
    %114 = vmatpush1.msra.mxu0 0.0
    %115 = vmatprep.subr.mxu0 0.0
    %116 = vmatpush1.msra.mxu0 0.0
    %117 = vmatprep.subr.mxu0 0.0
    %118 = vmatpush1.msra.mxu0 0.0
    %119 = vmatprep.subr.mxu0 0.0
    %120 = vmatpush1.msra.mxu0 0.0
    %121 = vmatprep.subr.mxu0 0.0
    %122 = vmatpush1.msra.mxu0 0.0
    %123 = vmatprep.subr.mxu0 0.0
    %124 = vmatpush1.msra.mxu0 0.0
    %125 = vmatprep.subr.mxu0 0.0
    %126 = vmatpush1.msra.mxu0 0.0
    %127 = vmatprep.subr.mxu0 0.0
    %128 = vmatpush1.msra.mxu0 0.0
    %129 = vmatprep.subr.mxu0 0.0
    %130 = vmatpush1.msra.mxu0 0.0
    %131 = vmatprep.subr.mxu0 0.0
    %132 = vmatpush1.msra.mxu0 0.0
    %133 = vmatprep.subr.mxu0 0.0
    %134 = vmatpush1.msra.mxu0 0.0
    %135 = vmatprep.subr.mxu0 0.0
    %136 = vmatpush1.msra.mxu0 0.0
    %137 = vmatprep.subr.mxu0 0.0
    %138 = vmatpush1.msra.mxu0 0.0
    %139 = vmatprep.subr.mxu0 0.0
    %140 = vmatpush1.msra.mxu0 0.0
    %141 = vmatprep.subr.mxu0 0.0
    %142 = vmatpush1.msra.mxu0 0.0
    %143 = vmatprep.subr.mxu0 0.0
    %144 = vmatpush1.msra.mxu0 0.0
    %145 = vmatprep.subr.mxu0 0.0
    %146 = vmatpush1.msra.mxu0 0.0
    %147 = vmatprep.subr.mxu0 0.0
    %148 = vmatpush1.msra.mxu0 0.0
    %149 = vmatprep.subr.mxu0 0.0
    %150 = vmatpush1.msra.mxu0 0.0
    %151 = vmatprep.subr.mxu0 0.0
    %152 = vmatpush1.msra.mxu0 0.0
    %153 = vmatprep.subr.mxu0 0.0
    %154 = vmatpush1.msra.mxu0 0.0
    %155 = vmatprep.subr.mxu0 0.0
    %156 = vmatpush1.msra.mxu0 0.0
    %157 = vmatprep.subr.mxu0 0.0
    %158 = vmatpush1.msra.mxu0 0.0
    %159 = vmatprep.subr.mxu0 0.0
    %160 = vmatpush1.msra.mxu0 0.0
    %161 = vmatprep.subr.mxu0 0.0
    %162 = vmatpush1.msra.mxu0 0.0
    %163 = vmatprep.subr.mxu0 0.0
    %164 = vmatpush1.msra.mxu0 0.0
    %165 = vmatprep.subr.mxu0 0.0
    %166 = vmatpush1.msra.mxu0 0.0
    %167 = vmatprep.subr.mxu0 0.0
    %168 = vmatpush1.msra.mxu0 0.0
    %169 = vmatprep.mubr.f32.mxu0 0.0
    %170 = vmatmul.mubr.f32.gmra.mrb[0].mxu0 %v99
    %v171 = vpop.f32.mrb[0].mxu0
    %v172 = vadd.f32 0.0, %v171
    %v173 = vpop.f32.mrb[0].mxu0
    %174 = vdwg.mxu0
    %175 = vxpose.xlu0.b32.start [1/16] %v60, 128
    %176 = vxpose.xlu0.b32.cont [2/16] 0.0, 128
    %177 = vxpose.xlu0.b32.cont [3/16] 0.0, 128
    %178 = vxpose.xlu0.b32.cont [4/16] 0.0, 128
    %179 = vxpose.xlu0.b32.cont [5/16] 0.0, 128
    %180 = vxpose.xlu0.b32.cont [6/16] 0.0, 128
    %181 = vxpose.xlu0.b32.cont [7/16] 0.0, 128
    %182 = vxpose.xlu0.b32.cont [8/16] 0.0, 128
    %183 = vxpose.xlu0.b32.cont [9/16] 0.0, 128
    %184 = vxpose.xlu0.b32.cont [10/16] 0.0, 128
    %185 = vxpose.xlu0.b32.cont [11/16] 0.0, 128
    %186 = vxpose.xlu0.b32.cont [12/16] 0.0, 128
    %187 = vxpose.xlu0.b32.cont [13/16] 0.0, 128
    %188 = vxpose.xlu0.b32.cont [14/16] 0.0, 128
    %189 = vxpose.xlu0.b32.cont [15/16] 0.0, 128
    %190 = vxpose.xlu0.b32.end [16/16] 0.0, 128
    %v191 = vpop.trf.xlu0
    %v192 = vpop.trf.xlu0
    %v193 = vpop.trf.xlu0
    %v194 = vpop.trf.xlu0
    %v195 = vpop.trf.xlu0
    %v196 = vpop.trf.xlu0
    %v197 = vpop.trf.xlu0
    %v198 = vpop.trf.xlu0
    %v199 = vpop.trf.xlu0
    %v200 = vpop.trf.xlu0
    %v201 = vpop.trf.xlu0
    %v202 = vpop.trf.xlu0
    %v203 = vpop.trf.xlu0
    %v204 = vpop.trf.xlu0
    %v205 = vpop.trf.xlu0
    %v206 = vpop.trf.xlu0
    %v208 = vsel %vm97, %v191, 0
    %v211 = vsel %vm101, %v55, 0
    %213 = vmatprep.subr.mxu0 0.0
    %214 = vmatpush1.msra.mxu0 %v211
    %215 = vmatprep.subr.mxu0 0.0
    %216 = vmatpush1.msra.mxu0 0.0
    %217 = vmatprep.subr.mxu0 0.0
    %218 = vmatpush1.msra.mxu0 0.0
    %219 = vmatprep.subr.mxu0 0.0
    %220 = vmatpush1.msra.mxu0 0.0
    %221 = vmatprep.subr.mxu0 0.0
    %222 = vmatpush1.msra.mxu0 0.0
    %223 = vmatprep.subr.mxu0 0.0
    %224 = vmatpush1.msra.mxu0 0.0
    %225 = vmatprep.subr.mxu0 0.0
    %226 = vmatpush1.msra.mxu0 0.0
    %227 = vmatprep.subr.mxu0 0.0
    %228 = vmatpush1.msra.mxu0 0.0
    %229 = vmatprep.subr.mxu0 0.0
    %230 = vmatpush1.msra.mxu0 0.0
    %231 = vmatprep.subr.mxu0 0.0
    %232 = vmatpush1.msra.mxu0 0.0
    %233 = vmatprep.subr.mxu0 0.0
    %234 = vmatpush1.msra.mxu0 0.0
    %235 = vmatprep.subr.mxu0 0.0
    %236 = vmatpush1.msra.mxu0 0.0
    %237 = vmatprep.subr.mxu0 0.0
    %238 = vmatpush1.msra.mxu0 0.0
    %239 = vmatprep.subr.mxu0 0.0
    %240 = vmatpush1.msra.mxu0 0.0
    %241 = vmatprep.subr.mxu0 0.0
    %242 = vmatpush1.msra.mxu0 0.0
    %243 = vmatprep.subr.mxu0 0.0
    %244 = vmatpush1.msra.mxu0 0.0
    %245 = vmatprep.subr.mxu0 0.0
    %246 = vmatpush1.msra.mxu0 0.0
    %247 = vmatprep.subr.mxu0 0.0
    %248 = vmatpush1.msra.mxu0 0.0
    %249 = vmatprep.subr.mxu0 0.0
    %250 = vmatpush1.msra.mxu0 0.0
    %251 = vmatprep.subr.mxu0 0.0
    %252 = vmatpush1.msra.mxu0 0.0
    %253 = vmatprep.subr.mxu0 0.0
    %254 = vmatpush1.msra.mxu0 0.0
    %255 = vmatprep.subr.mxu0 0.0
    %256 = vmatpush1.msra.mxu0 0.0
    %257 = vmatprep.subr.mxu0 0.0
    %258 = vmatpush1.msra.mxu0 0.0
    %259 = vmatprep.subr.mxu0 0.0
    %260 = vmatpush1.msra.mxu0 0.0
    %261 = vmatprep.subr.mxu0 0.0
    %262 = vmatpush1.msra.mxu0 0.0
    %263 = vmatprep.subr.mxu0 0.0
    %264 = vmatpush1.msra.mxu0 0.0
    %265 = vmatprep.subr.mxu0 0.0
    %266 = vmatpush1.msra.mxu0 0.0
    %267 = vmatprep.subr.mxu0 0.0
    %268 = vmatpush1.msra.mxu0 0.0
    %269 = vmatprep.subr.mxu0 0.0
    %270 = vmatpush1.msra.mxu0 0.0
    %271 = vmatprep.subr.mxu0 0.0
    %272 = vmatpush1.msra.mxu0 0.0
    %273 = vmatprep.subr.mxu0 0.0
    %274 = vmatpush1.msra.mxu0 0.0
    %275 = vmatprep.subr.mxu0 0.0
    %276 = vmatpush1.msra.mxu0 0.0
    %277 = vmatprep.mubr.f32.mxu0 0.0
    %278 = vmatmul.mubr.f32.gmra.mrb[0].mxu0 %v208
    %v279 = vpop.f32.mrb[0].mxu0
    %v280 = vadd.f32 %v172, %v279
    %v281 = vpop.f32.mrb[0].mxu0
    %282 = vdwg.mxu0
    %283 = vrot.lane.b32.xlu0 %v60, 126
    %v284 = vpop.permute.xlu0 %283
    %286 = vxpose.xlu0.b32.start [1/16] %v284, 128
    %287 = vxpose.xlu0.b32.cont [2/16] 0.0, 128
    %288 = vxpose.xlu0.b32.cont [3/16] 0.0, 128
    %289 = vxpose.xlu0.b32.cont [4/16] 0.0, 128
    %290 = vxpose.xlu0.b32.cont [5/16] 0.0, 128
    %291 = vxpose.xlu0.b32.cont [6/16] 0.0, 128
    %292 = vxpose.xlu0.b32.cont [7/16] 0.0, 128
    %293 = vxpose.xlu0.b32.cont [8/16] 0.0, 128
    %294 = vxpose.xlu0.b32.cont [9/16] 0.0, 128
    %295 = vxpose.xlu0.b32.cont [10/16] 0.0, 128
    %296 = vxpose.xlu0.b32.cont [11/16] 0.0, 128
    %297 = vxpose.xlu0.b32.cont [12/16] 0.0, 128
    %298 = vxpose.xlu0.b32.cont [13/16] 0.0, 128
    %299 = vxpose.xlu0.b32.cont [14/16] 0.0, 128
    %300 = vxpose.xlu0.b32.cont [15/16] 0.0, 128
    %301 = vxpose.xlu0.b32.end [16/16] 0.0, 128
    %v302 = vpop.trf.xlu0
    %v303 = vpop.trf.xlu0
    %v304 = vpop.trf.xlu0
    %v305 = vpop.trf.xlu0
    %v306 = vpop.trf.xlu0
    %v307 = vpop.trf.xlu0
    %v308 = vpop.trf.xlu0
    %v309 = vpop.trf.xlu0
    %v310 = vpop.trf.xlu0
    %v311 = vpop.trf.xlu0
    %v312 = vpop.trf.xlu0
    %v313 = vpop.trf.xlu0
    %v314 = vpop.trf.xlu0
    %v315 = vpop.trf.xlu0
    %v316 = vpop.trf.xlu0
    %v317 = vpop.trf.xlu0
    %v319 = vsel %vm97, %v302, 0
    %v322 = vsel %vm101, %v59, 0
    %324 = vmatprep.subr.mxu0 0.0
    %325 = vmatpush1.msra.mxu0 %v322
    %326 = vmatprep.subr.mxu0 0.0
    %327 = vmatpush1.msra.mxu0 0.0
    %328 = vmatprep.subr.mxu0 0.0
    %329 = vmatpush1.msra.mxu0 0.0
    %330 = vmatprep.subr.mxu0 0.0
    %331 = vmatpush1.msra.mxu0 0.0
    %332 = vmatprep.subr.mxu0 0.0
    %333 = vmatpush1.msra.mxu0 0.0
    %334 = vmatprep.subr.mxu0 0.0
    %335 = vmatpush1.msra.mxu0 0.0
    %336 = vmatprep.subr.mxu0 0.0
    %337 = vmatpush1.msra.mxu0 0.0
    %338 = vmatprep.subr.mxu0 0.0
    %339 = vmatpush1.msra.mxu0 0.0
    %340 = vmatprep.subr.mxu0 0.0
    %341 = vmatpush1.msra.mxu0 0.0
    %342 = vmatprep.subr.mxu0 0.0
    %343 = vmatpush1.msra.mxu0 0.0
    %344 = vmatprep.subr.mxu0 0.0
    %345 = vmatpush1.msra.mxu0 0.0
    %346 = vmatprep.subr.mxu0 0.0
    %347 = vmatpush1.msra.mxu0 0.0
    %348 = vmatprep.subr.mxu0 0.0
    %349 = vmatpush1.msra.mxu0 0.0
    %350 = vmatprep.subr.mxu0 0.0
    %351 = vmatpush1.msra.mxu0 0.0
    %352 = vmatprep.subr.mxu0 0.0
    %353 = vmatpush1.msra.mxu0 0.0
    %354 = vmatprep.subr.mxu0 0.0
    %355 = vmatpush1.msra.mxu0 0.0
    %356 = vmatprep.subr.mxu0 0.0
    %357 = vmatpush1.msra.mxu0 0.0
    %358 = vmatprep.subr.mxu0 0.0
    %359 = vmatpush1.msra.mxu0 0.0
    %360 = vmatprep.subr.mxu0 0.0
    %361 = vmatpush1.msra.mxu0 0.0
    %362 = vmatprep.subr.mxu0 0.0
    %363 = vmatpush1.msra.mxu0 0.0
    %364 = vmatprep.subr.mxu0 0.0
    %365 = vmatpush1.msra.mxu0 0.0
    %366 = vmatprep.subr.mxu0 0.0
    %367 = vmatpush1.msra.mxu0 0.0
    %368 = vmatprep.subr.mxu0 0.0
    %369 = vmatpush1.msra.mxu0 0.0
    %370 = vmatprep.subr.mxu0 0.0
    %371 = vmatpush1.msra.mxu0 0.0
    %372 = vmatprep.subr.mxu0 0.0
    %373 = vmatpush1.msra.mxu0 0.0
    %374 = vmatprep.subr.mxu0 0.0
    %375 = vmatpush1.msra.mxu0 0.0
    %376 = vmatprep.subr.mxu0 0.0
    %377 = vmatpush1.msra.mxu0 0.0
    %378 = vmatprep.subr.mxu0 0.0
    %379 = vmatpush1.msra.mxu0 0.0
    %380 = vmatprep.subr.mxu0 0.0
    %381 = vmatpush1.msra.mxu0 0.0
    %382 = vmatprep.subr.mxu0 0.0
    %383 = vmatpush1.msra.mxu0 0.0
    %384 = vmatprep.subr.mxu0 0.0
    %385 = vmatpush1.msra.mxu0 0.0
    %386 = vmatprep.subr.mxu0 0.0
    %387 = vmatpush1.msra.mxu0 0.0
    %388 = vmatprep.mubr.f32.mxu0 0.0
    %389 = vmatmul.mubr.f32.gmra.mrb[0].mxu0 %v319
    %v390 = vpop.f32.mrb[0].mxu0
    %v391 = vadd.f32 0.0, %v390
    %v392 = vpop.f32.mrb[0].mxu0
    %393 = vdwg.mxu0
    %v394 = vadd.f32 %v280, %v391
    %v395 = vadd.f32 %v394, %v54
    %396 = vst [vmem:[#allocation8] sm:$0xff] %v395
    %s397 = scalar_lea.vmem [#allocation2], 4
    %v398 = vld [vmem:[%s397] sm:$0xf]
    %400 = vrot.lane.b32.xlu0 %v398, 127
    %v401 = vpop.permute.xlu0 %400
    %403 = vxpose.xlu0.b32.start [1/16] %v401, 128
    %404 = vxpose.xlu0.b32.cont [2/16] 0.0, 128
    %405 = vxpose.xlu0.b32.cont [3/16] 0.0, 128
    %406 = vxpose.xlu0.b32.cont [4/16] 0.0, 128
    %407 = vxpose.xlu0.b32.cont [5/16] 0.0, 128
    %408 = vxpose.xlu0.b32.cont [6/16] 0.0, 128
    %409 = vxpose.xlu0.b32.cont [7/16] 0.0, 128
    %410 = vxpose.xlu0.b32.cont [8/16] 0.0, 128
    %411 = vxpose.xlu0.b32.cont [9/16] 0.0, 128
    %412 = vxpose.xlu0.b32.cont [10/16] 0.0, 128
    %413 = vxpose.xlu0.b32.cont [11/16] 0.0, 128
    %414 = vxpose.xlu0.b32.cont [12/16] 0.0, 128
    %415 = vxpose.xlu0.b32.cont [13/16] 0.0, 128
    %416 = vxpose.xlu0.b32.cont [14/16] 0.0, 128
    %417 = vxpose.xlu0.b32.cont [15/16] 0.0, 128
    %418 = vxpose.xlu0.b32.end [16/16] 0.0, 128
    %v419 = vpop.trf.xlu0
    %v420 = vpop.trf.xlu0
    %v421 = vpop.trf.xlu0
    %v422 = vpop.trf.xlu0
    %v423 = vpop.trf.xlu0
    %v424 = vpop.trf.xlu0
    %v425 = vpop.trf.xlu0
    %v426 = vpop.trf.xlu0
    %v427 = vpop.trf.xlu0
    %v428 = vpop.trf.xlu0
    %v429 = vpop.trf.xlu0
    %v430 = vpop.trf.xlu0
    %v431 = vpop.trf.xlu0
    %v432 = vpop.trf.xlu0
    %v433 = vpop.trf.xlu0
    %v434 = vpop.trf.xlu0
    %v436 = vsel %vm97, %v419, 0
    %438 = vmatprep.subr.mxu0 0.0
    %439 = vmatpush1.msra.mxu0 %v103
    %440 = vmatprep.subr.mxu0 0.0
    %441 = vmatpush1.msra.mxu0 0.0
    %442 = vmatprep.subr.mxu0 0.0
    %443 = vmatpush1.msra.mxu0 0.0
    %444 = vmatprep.subr.mxu0 0.0
    %445 = vmatpush1.msra.mxu0 0.0
    %446 = vmatprep.subr.mxu0 0.0
    %447 = vmatpush1.msra.mxu0 0.0
    %448 = vmatprep.subr.mxu0 0.0
    %449 = vmatpush1.msra.mxu0 0.0
    %450 = vmatprep.subr.mxu0 0.0
    %451 = vmatpush1.msra.mxu0 0.0
    %452 = vmatprep.subr.mxu0 0.0
    %453 = vmatpush1.msra.mxu0 0.0
    %454 = vmatprep.subr.mxu0 0.0
    %455 = vmatpush1.msra.mxu0 0.0
    %456 = vmatprep.subr.mxu0 0.0
    %457 = vmatpush1.msra.mxu0 0.0
    %458 = vmatprep.subr.mxu0 0.0
    %459 = vmatpush1.msra.mxu0 0.0
    %460 = vmatprep.subr.mxu0 0.0
    %461 = vmatpush1.msra.mxu0 0.0
    %462 = vmatprep.subr.mxu0 0.0
    %463 = vmatpush1.msra.mxu0 0.0
    %464 = vmatprep.subr.mxu0 0.0
    %465 = vmatpush1.msra.mxu0 0.0
    %466 = vmatprep.subr.mxu0 0.0
    %467 = vmatpush1.msra.mxu0 0.0
    %468 = vmatprep.subr.mxu0 0.0
    %469 = vmatpush1.msra.mxu0 0.0
    %470 = vmatprep.subr.mxu0 0.0
    %471 = vmatpush1.msra.mxu0 0.0
    %472 = vmatprep.subr.mxu0 0.0
    %473 = vmatpush1.msra.mxu0 0.0
    %474 = vmatprep.subr.mxu0 0.0
    %475 = vmatpush1.msra.mxu0 0.0
    %476 = vmatprep.subr.mxu0 0.0
    %477 = vmatpush1.msra.mxu0 0.0
    %478 = vmatprep.subr.mxu0 0.0
    %479 = vmatpush1.msra.mxu0 0.0
    %480 = vmatprep.subr.mxu0 0.0
    %481 = vmatpush1.msra.mxu0 0.0
    %482 = vmatprep.subr.mxu0 0.0
    %483 = vmatpush1.msra.mxu0 0.0
    %484 = vmatprep.subr.mxu0 0.0
    %485 = vmatpush1.msra.mxu0 0.0
    %486 = vmatprep.subr.mxu0 0.0
    %487 = vmatpush1.msra.mxu0 0.0
    %488 = vmatprep.subr.mxu0 0.0
    %489 = vmatpush1.msra.mxu0 0.0
    %490 = vmatprep.subr.mxu0 0.0
    %491 = vmatpush1.msra.mxu0 0.0
    %492 = vmatprep.subr.mxu0 0.0
    %493 = vmatpush1.msra.mxu0 0.0
    %494 = vmatprep.subr.mxu0 0.0
    %495 = vmatpush1.msra.mxu0 0.0
    %496 = vmatprep.subr.mxu0 0.0
    %497 = vmatpush1.msra.mxu0 0.0
    %498 = vmatprep.subr.mxu0 0.0
    %499 = vmatpush1.msra.mxu0 0.0
    %500 = vmatprep.subr.mxu0 0.0
    %501 = vmatpush1.msra.mxu0 0.0
    %502 = vmatprep.mubr.f32.mxu0 0.0
    %503 = vmatmul.mubr.f32.gmra.mrb[0].mxu0 %v436
    %v504 = vpop.f32.mrb[0].mxu0
    %v505 = vadd.f32 0.0, %v504
    %v506 = vpop.f32.mrb[0].mxu0
    %507 = vdwg.mxu0
    %508 = vxpose.xlu0.b32.start [1/16] %v398, 128
    %509 = vxpose.xlu0.b32.cont [2/16] 0.0, 128
    %510 = vxpose.xlu0.b32.cont [3/16] 0.0, 128
    %511 = vxpose.xlu0.b32.cont [4/16] 0.0, 128
    %512 = vxpose.xlu0.b32.cont [5/16] 0.0, 128
    %513 = vxpose.xlu0.b32.cont [6/16] 0.0, 128
    %514 = vxpose.xlu0.b32.cont [7/16] 0.0, 128
    %515 = vxpose.xlu0.b32.cont [8/16] 0.0, 128
    %516 = vxpose.xlu0.b32.cont [9/16] 0.0, 128
    %517 = vxpose.xlu0.b32.cont [10/16] 0.0, 128
    %518 = vxpose.xlu0.b32.cont [11/16] 0.0, 128
    %519 = vxpose.xlu0.b32.cont [12/16] 0.0, 128
    %520 = vxpose.xlu0.b32.cont [13/16] 0.0, 128
    %521 = vxpose.xlu0.b32.cont [14/16] 0.0, 128
    %522 = vxpose.xlu0.b32.cont [15/16] 0.0, 128
    %523 = vxpose.xlu0.b32.end [16/16] 0.0, 128
    %v524 = vpop.trf.xlu0
    %v525 = vpop.trf.xlu0
    %v526 = vpop.trf.xlu0
    %v527 = vpop.trf.xlu0
    %v528 = vpop.trf.xlu0
    %v529 = vpop.trf.xlu0
    %v530 = vpop.trf.xlu0
    %v531 = vpop.trf.xlu0
    %v532 = vpop.trf.xlu0
    %v533 = vpop.trf.xlu0
    %v534 = vpop.trf.xlu0
    %v535 = vpop.trf.xlu0
    %v536 = vpop.trf.xlu0
    %v537 = vpop.trf.xlu0
    %v538 = vpop.trf.xlu0
    %v539 = vpop.trf.xlu0
    %v541 = vsel %vm97, %v524, 0
    %543 = vmatprep.subr.mxu0 0.0
    %544 = vmatpush1.msra.mxu0 %v211
    %545 = vmatprep.subr.mxu0 0.0
    %546 = vmatpush1.msra.mxu0 0.0
    %547 = vmatprep.subr.mxu0 0.0
    %548 = vmatpush1.msra.mxu0 0.0
    %549 = vmatprep.subr.mxu0 0.0
    %550 = vmatpush1.msra.mxu0 0.0
    %551 = vmatprep.subr.mxu0 0.0
    %552 = vmatpush1.msra.mxu0 0.0
    %553 = vmatprep.subr.mxu0 0.0
    %554 = vmatpush1.msra.mxu0 0.0
    %555 = vmatprep.subr.mxu0 0.0
    %556 = vmatpush1.msra.mxu0 0.0
    %557 = vmatprep.subr.mxu0 0.0
    %558 = vmatpush1.msra.mxu0 0.0
    %559 = vmatprep.subr.mxu0 0.0
    %560 = vmatpush1.msra.mxu0 0.0
    %561 = vmatprep.subr.mxu0 0.0
    %562 = vmatpush1.msra.mxu0 0.0
    %563 = vmatprep.subr.mxu0 0.0
    %564 = vmatpush1.msra.mxu0 0.0
    %565 = vmatprep.subr.mxu0 0.0
    %566 = vmatpush1.msra.mxu0 0.0
    %567 = vmatprep.subr.mxu0 0.0
    %568 = vmatpush1.msra.mxu0 0.0
    %569 = vmatprep.subr.mxu0 0.0
    %570 = vmatpush1.msra.mxu0 0.0
    %571 = vmatprep.subr.mxu0 0.0
    %572 = vmatpush1.msra.mxu0 0.0
    %573 = vmatprep.subr.mxu0 0.0
    %574 = vmatpush1.msra.mxu0 0.0
    %575 = vmatprep.subr.mxu0 0.0
    %576 = vmatpush1.msra.mxu0 0.0
    %577 = vmatprep.subr.mxu0 0.0
    %578 = vmatpush1.msra.mxu0 0.0
    %579 = vmatprep.subr.mxu0 0.0
    %580 = vmatpush1.msra.mxu0 0.0
    %581 = vmatprep.subr.mxu0 0.0
    %582 = vmatpush1.msra.mxu0 0.0
    %583 = vmatprep.subr.mxu0 0.0
    %584 = vmatpush1.msra.mxu0 0.0
    %585 = vmatprep.subr.mxu0 0.0
    %586 = vmatpush1.msra.mxu0 0.0
    %587 = vmatprep.subr.mxu0 0.0
    %588 = vmatpush1.msra.mxu0 0.0
    %589 = vmatprep.subr.mxu0 0.0
    %590 = vmatpush1.msra.mxu0 0.0
    %591 = vmatprep.subr.mxu0 0.0
    %592 = vmatpush1.msra.mxu0 0.0
    %593 = vmatprep.subr.mxu0 0.0
    %594 = vmatpush1.msra.mxu0 0.0
    %595 = vmatprep.subr.mxu0 0.0
    %596 = vmatpush1.msra.mxu0 0.0
    %597 = vmatprep.subr.mxu0 0.0
    %598 = vmatpush1.msra.mxu0 0.0
    %599 = vmatprep.subr.mxu0 0.0
    %600 = vmatpush1.msra.mxu0 0.0
    %601 = vmatprep.subr.mxu0 0.0
    %602 = vmatpush1.msra.mxu0 0.0
    %603 = vmatprep.subr.mxu0 0.0
    %604 = vmatpush1.msra.mxu0 0.0
    %605 = vmatprep.subr.mxu0 0.0
    %606 = vmatpush1.msra.mxu0 0.0
    %607 = vmatprep.mubr.f32.mxu0 0.0
    %608 = vmatmul.mubr.f32.gmra.mrb[0].mxu0 %v541
    %v609 = vpop.f32.mrb[0].mxu0
    %v610 = vadd.f32 %v505, %v609
    %v611 = vpop.f32.mrb[0].mxu0
    %612 = vdwg.mxu0
    %613 = vrot.lane.b32.xlu0 %v398, 126
    %v614 = vpop.permute.xlu0 %613
    %616 = vxpose.xlu0.b32.start [1/16] %v614, 128
    %617 = vxpose.xlu0.b32.cont [2/16] 0.0, 128
    %618 = vxpose.xlu0.b32.cont [3/16] 0.0, 128
    %619 = vxpose.xlu0.b32.cont [4/16] 0.0, 128
    %620 = vxpose.xlu0.b32.cont [5/16] 0.0, 128
    %621 = vxpose.xlu0.b32.cont [6/16] 0.0, 128
    %622 = vxpose.xlu0.b32.cont [7/16] 0.0, 128
    %623 = vxpose.xlu0.b32.cont [8/16] 0.0, 128
    %624 = vxpose.xlu0.b32.cont [9/16] 0.0, 128
    %625 = vxpose.xlu0.b32.cont [10/16] 0.0, 128
    %626 = vxpose.xlu0.b32.cont [11/16] 0.0, 128
    %627 = vxpose.xlu0.b32.cont [12/16] 0.0, 128
    %628 = vxpose.xlu0.b32.cont [13/16] 0.0, 128
    %629 = vxpose.xlu0.b32.cont [14/16] 0.0, 128
    %630 = vxpose.xlu0.b32.cont [15/16] 0.0, 128
    %631 = vxpose.xlu0.b32.end [16/16] 0.0, 128
    %v632 = vpop.trf.xlu0
    %v633 = vpop.trf.xlu0
    %v634 = vpop.trf.xlu0
    %v635 = vpop.trf.xlu0
    %v636 = vpop.trf.xlu0
    %v637 = vpop.trf.xlu0
    %v638 = vpop.trf.xlu0
    %v639 = vpop.trf.xlu0
    %v640 = vpop.trf.xlu0
    %v641 = vpop.trf.xlu0
    %v642 = vpop.trf.xlu0
    %v643 = vpop.trf.xlu0
    %v644 = vpop.trf.xlu0
    %v645 = vpop.trf.xlu0
    %v646 = vpop.trf.xlu0
    %v647 = vpop.trf.xlu0
    %v649 = vsel %vm97, %v632, 0
    %651 = vmatprep.subr.mxu0 0.0
    %652 = vmatpush1.msra.mxu0 %v322
    %653 = vmatprep.subr.mxu0 0.0
    %654 = vmatpush1.msra.mxu0 0.0
    %655 = vmatprep.subr.mxu0 0.0
    %656 = vmatpush1.msra.mxu0 0.0
    %657 = vmatprep.subr.mxu0 0.0
    %658 = vmatpush1.msra.mxu0 0.0
    %659 = vmatprep.subr.mxu0 0.0
    %660 = vmatpush1.msra.mxu0 0.0
    %661 = vmatprep.subr.mxu0 0.0
    %662 = vmatpush1.msra.mxu0 0.0
    %663 = vmatprep.subr.mxu0 0.0
    %664 = vmatpush1.msra.mxu0 0.0
    %665 = vmatprep.subr.mxu0 0.0
    %666 = vmatpush1.msra.mxu0 0.0
    %667 = vmatprep.subr.mxu0 0.0
    %668 = vmatpush1.msra.mxu0 0.0
    %669 = vmatprep.subr.mxu0 0.0
    %670 = vmatpush1.msra.mxu0 0.0
    %671 = vmatprep.subr.mxu0 0.0
    %672 = vmatpush1.msra.mxu0 0.0
    %673 = vmatprep.subr.mxu0 0.0
    %674 = vmatpush1.msra.mxu0 0.0
    %675 = vmatprep.subr.mxu0 0.0
    %676 = vmatpush1.msra.mxu0 0.0
    %677 = vmatprep.subr.mxu0 0.0
    %678 = vmatpush1.msra.mxu0 0.0
    %679 = vmatprep.subr.mxu0 0.0
    %680 = vmatpush1.msra.mxu0 0.0
    %681 = vmatprep.subr.mxu0 0.0
    %682 = vmatpush1.msra.mxu0 0.0
    %683 = vmatprep.subr.mxu0 0.0
    %684 = vmatpush1.msra.mxu0 0.0
    %685 = vmatprep.subr.mxu0 0.0
    %686 = vmatpush1.msra.mxu0 0.0
    %687 = vmatprep.subr.mxu0 0.0
    %688 = vmatpush1.msra.mxu0 0.0
    %689 = vmatprep.subr.mxu0 0.0
    %690 = vmatpush1.msra.mxu0 0.0
    %691 = vmatprep.subr.mxu0 0.0
    %692 = vmatpush1.msra.mxu0 0.0
    %693 = vmatprep.subr.mxu0 0.0
    %694 = vmatpush1.msra.mxu0 0.0
    %695 = vmatprep.subr.mxu0 0.0
    %696 = vmatpush1.msra.mxu0 0.0
    %697 = vmatprep.subr.mxu0 0.0
    %698 = vmatpush1.msra.mxu0 0.0
    %699 = vmatprep.subr.mxu0 0.0
    %700 = vmatpush1.msra.mxu0 0.0
    %701 = vmatprep.subr.mxu0 0.0
    %702 = vmatpush1.msra.mxu0 0.0
    %703 = vmatprep.subr.mxu0 0.0
    %704 = vmatpush1.msra.mxu0 0.0
    %705 = vmatprep.subr.mxu0 0.0
    %706 = vmatpush1.msra.mxu0 0.0
    %707 = vmatprep.subr.mxu0 0.0
    %708 = vmatpush1.msra.mxu0 0.0
    %709 = vmatprep.subr.mxu0 0.0
    %710 = vmatpush1.msra.mxu0 0.0
    %711 = vmatprep.subr.mxu0 0.0
    %712 = vmatpush1.msra.mxu0 0.0
    %713 = vmatprep.subr.mxu0 0.0
    %714 = vmatpush1.msra.mxu0 0.0
    %715 = vmatprep.mubr.f32.mxu0 0.0
    %716 = vmatmul.mubr.f32.gmra.mrb[0].mxu0 %v649
    %v717 = vpop.f32.mrb[0].mxu0
    %v718 = vadd.f32 0.0, %v717
    %v719 = vpop.f32.mrb[0].mxu0
    %720 = vdwg.mxu0
    %v721 = vadd.f32 %v610, %v718
    %v722 = vadd.f32 %v721, %v54
    %s723 = scalar_lea.vmem [#allocation8], 8
    %724 = vst [vmem:[%s723] sm:$0xff] %v722
    // Predicated region
    $region26: #{tpu_custom_call.1} parent=1 // pred_check
      _
    $region27: #{tpu_custom_call.1} parent=1 // pred_check_branch
      %726 = sbr.rel (0) target = $region29
    $region28: #{tpu_custom_call.1} parent=1 // pred_region
      %s728 = ssub.s32 256, 256
      %729 = vsyncadd [#allocation4], %s728
      %s730 = sshll.u32 [#allocation8], 4
      %s731 = int_to_ptr.vmem [resolvable:$true] %s730
      %736 = dma.vmem_to_hbm [thread:$0]  %s731, 256, %s3, [#allocation4], 128, 128, 8
    $region29: #{tpu_custom_call.1} parent=1 // pred_fallthru
      _
    // Predicated region
    $region30: #{tpu_custom_call.1} parent=1 // pred_check
      _
    $region31: #{tpu_custom_call.1} parent=1 // pred_check_branch
      %738 = sbr.rel (0) target = $region33
    $region32: #{tpu_custom_call.1} parent=1 // pred_region
      %739 = dma.done [#allocation4], 256
    $region33: #{tpu_custom_call.1} parent=1 // pred_fallthru
      _
    %740 = vsyncpa [#allocation3], 1
    %741 = vsyncpa [#allocation6], 1
    %742 = vsyncpa [#allocation4], 1

</llo_original>
